<compile_context>
chip_gen: v6e
topology: v6e:2x2x1
jax: 0.10.0
libtpu: 0.0.40
codegen_flags: <defaults>
</compile_context>

<pallas_src>
import jax
import jax.numpy as jnp
from jax.experimental import pallas as pl
from jax.experimental.pallas import tpu as pltpu


def _linear_kernel(x_ref, w_ref, b_ref, o_ref):
    """One (TILE_B, IN) x-tile against the resident (IN, OUT) weight."""
    x = x_ref[...]
    if x.dtype != w_ref.dtype:
        # Fused input cast — only traced if the caller passed a non-module
        # dtype; in the normal bf16-in / bf16-out path this is a no-op.
        x = x.astype(w_ref.dtype)
    # bf16 x bf16 on the MXU with an f32 accumulator — the native MXU path on
    # v5e / v6e / v7x (no f32-emulated multi-pass matmul, no VPU upcasts).
    acc = jnp.dot(x, w_ref[...], preferred_element_type=jnp.float32)
    acc = acc + b_ref[...]                 # bias already f32, VMEM-resident
    o_ref[...] = acc.astype(o_ref.dtype)


def _pick_tile_b(batch):
    """Largest batch tile (multiple of 8 sublanes) that evenly divides B."""
    for t in (512, 256, 128, 64, 32, 16, 8):
        if batch % t == 0:
            return t
    return batch  # ragged batch: fall back to a single full-array block


class DataParallel:
    """JAX/Pallas analogue of the PyTorch DataParallel wrapper.

    Holds the wrapped Linear's parameters (already "broadcast": built
    deterministically so all replicas agree) and forwards inputs untouched.
    """

    def __init__(self, params, module_dtype, dp_rank=0, dp_world_size=1):
        self.module_dtype = module_dtype
        self.dp_rank = dp_rank
        self.dp_world_size = dp_world_size
        self.require_backward_grad_sync = True
        # _broadcast_weights(): with a single-replica process group the
        # broadcast from src=0 is an identity; params are already identical.
        self.w, self.b = params            # w: (IN, OUT) bf16, b: (1, OUT) bf16
        # Hoisted once: f32 bias for the in-kernel accumulator add (avoids a
        # per-grid-step cast inside the kernel body).
        self.b_f32 = self.b.astype(jnp.float32)

    def __call__(self, x):
        # forward(*inputs) -> self.module(*inputs)  (pass-through to Linear).
        B = x.shape[0]
        IN, OUT = self.w.shape
        tile_b = _pick_tile_b(B)
        grid = (B // tile_b,)
        return pl.pallas_call(
            _linear_kernel,
            out_shape=jax.ShapeDtypeStruct((B, OUT), self.module_dtype),
            grid=grid,
            in_specs=[
                pl.BlockSpec((tile_b, IN), lambda i: (i, 0)),   # streamed x
                pl.BlockSpec((IN, OUT), lambda i: (0, 0)),      # resident W
                pl.BlockSpec((1, OUT), lambda i: (0, 0)),       # resident bias
            ],
            out_specs=pl.BlockSpec((tile_b, OUT), lambda i: (i, 0)),
            compiler_params=pltpu.CompilerParams(
                dimension_semantics=("parallel",)),
        )(x, self.w, self.b_f32)

    def finish_gradient_synchronization(self):
        # TODO(synk): backward-pass gradient all-reduce (dist.all_reduce) has no
        # forward-path equivalent here; in a multi-chip setting this would be a
        # Pallas ring reduce-scatter/all-gather via pltpu.make_async_remote_copy
        # + pltpu.get_barrier_semaphore (CompilerParams(collective_id=...)),
        # interleaved one ring step per backward-matmul grid iteration.
        raise NotImplementedError


def make_linear_params(key, in_features, out_features, dtype):
    """Deterministic init (stands in for rank-0 weights that get broadcast)."""
    kw, kb = jax.random.split(key)
    bound = 1.0 / (in_features ** 0.5)
    w = jax.random.uniform(kw, (in_features, out_features), jnp.float32,
                           minval=-bound, maxval=bound)
    b = jax.random.uniform(kb, (1, out_features), jnp.float32,
                           minval=-bound, maxval=bound)
    return w.astype(dtype), b.astype(dtype)


if __name__ == "__main__":
    key = jax.random.PRNGKey(0)
    k_param, k_x = jax.random.split(key)

    # Lane-dense feature dims (128 = one full vreg lane width); batch big
    # enough to exercise the tiled grid (2 tiles of 256 rows).
    IN, OUT, BATCH = 128, 128, 512
    MODULE_DTYPE = jnp.bfloat16

    params = make_linear_params(k_param, IN, OUT, MODULE_DTYPE)
    ddp_model = DataParallel(params, module_dtype=MODULE_DTYPE)

    # Inputs arrive already in the module dtype (the usual DP training setup),
    # so there is no cast anywhere on the forward path.
    x = jax.random.normal(k_x, (BATCH, IN), jnp.float32).astype(MODULE_DTYPE)

    y = jax.block_until_ready(ddp_model(x))

    # Reference check: DataParallel.forward == wrapped Linear forward.
    ref = (x.astype(jnp.float32) @ params[0].astype(jnp.float32)
           + params[1].astype(jnp.float32)).astype(MODULE_DTYPE)
    assert y.shape == (BATCH, OUT) and y.dtype == MODULE_DTYPE
    assert jnp.allclose(y.astype(jnp.float32), ref.astype(jnp.float32),
                        atol=2e-2, rtol=2e-2)

    print("KERNEL_OK")
</pallas_src>

<mosaic_0001>
module attributes {stable_mosaic.version = 11 : i64} {
  func.func @_linear_kernel(%arg0: i32, %arg1: memref<512x128xbf16, #tpu.memory_space<vmem>>, %arg2: memref<128x128xbf16, #tpu.memory_space<vmem>>, %arg3: memref<1x128xf32, #tpu.memory_space<vmem>>, %arg4: memref<512x128xbf16, #tpu.memory_space<vmem>>) attributes {dimension_semantics = [#tpu.dimension_semantics<parallel>], iteration_bounds = array<i64: 1>, scalar_prefetch = 0 : i64, scratch_operands = 0 : i64, tpu.core_type = #tpu.core_type<tc>, window_params = [{transform_indices = @transform_0, window_bounds = array<i64: 512, 128>}, {pipeline_mode = #tpu.pipeline_mode<synchronous>, transform_indices = @transform_1, window_bounds = array<i64: 128, 128>}, {pipeline_mode = #tpu.pipeline_mode<synchronous>, transform_indices = @transform_2, window_bounds = array<i64: 1, 128>}, {transform_indices = @transform_3, window_bounds = array<i64: 512, 128>}]} {
    %c0 = arith.constant 0 : index
    %c0_0 = arith.constant 0 : index
    %0 = vector.load %arg1[%c0, %c0_0] : memref<512x128xbf16, #tpu.memory_space<vmem>>, vector<512x128xbf16>
    %c0_1 = arith.constant 0 : index
    %c0_2 = arith.constant 0 : index
    %1 = vector.load %arg2[%c0_1, %c0_2] : memref<128x128xbf16, #tpu.memory_space<vmem>>, vector<128x128xbf16>
    %cst = arith.constant dense<0.000000e+00> : vector<512x128xf32>
    %2 = tpu.matmul %0, %1, %cst {dimension_numbers = #tpu.dot_dimension_numbers<[1], [0], [0], [1], [0, 0, 1, 1], [], []>} : vector<512x128xbf16>, vector<128x128xbf16>, vector<512x128xf32> -> vector<512x128xf32>
    %c0_3 = arith.constant 0 : index
    %c0_4 = arith.constant 0 : index
    %3 = vector.load %arg3[%c0_3, %c0_4] : memref<1x128xf32, #tpu.memory_space<vmem>>, vector<1x128xf32>
    %4 = vector.broadcast %3 : vector<1x128xf32> to vector<512x128xf32>
    %5 = arith.addf %2, %4 : vector<512x128xf32>
    %6 = arith.truncf %5 : vector<512x128xf32> to vector<512x128xbf16>
    %c0_5 = arith.constant 0 : index
    %c0_6 = arith.constant 0 : index
    %7 = vector.load %arg4[%c0_5, %c0_6] : memref<512x128xbf16, #tpu.memory_space<vmem>>, vector<512x128xbf16>
    tpu.vector_store %arg4[%c0_5, %c0_6], %6 {strides = array<i32>} : memref<512x128xbf16, #tpu.memory_space<vmem>>, vector<512x128xbf16>,
    return
  }
  func.func @transform_0(%arg0: i32) -> (i32, i32) {
    %c0_i32 = arith.constant 0 : i32
    %c0_i32_0 = arith.constant 0 : i32
    return %arg0, %c0_i32 : i32, i32
  }
  func.func @transform_1(%arg0: i32) -> (i32, i32) {
    %c0_i32 = arith.constant 0 : i32
    %c0_i32_0 = arith.constant 0 : i32
    %c0_i32_1 = arith.constant 0 : i32
    return %c0_i32, %c0_i32_0 : i32, i32
  }
  func.func @transform_2(%arg0: i32) -> (i32, i32) {
    %c0_i32 = arith.constant 0 : i32
    %c0_i32_0 = arith.constant 0 : i32
    %c0_i32_1 = arith.constant 0 : i32
    return %c0_i32, %c0_i32_0 : i32, i32
  }
  func.func @transform_3(%arg0: i32) -> (i32, i32) {
    %c0_i32 = arith.constant 0 : i32
    %c0_i32_0 = arith.constant 0 : i32
    return %arg0, %c0_i32 : i32, i32
  }
}

</mosaic_0001>

<llo_original>
// kernel: tpu_custom_call.1
$region0: #{tpu_custom_call.1}
  #allocation0 [shape = 'u32[]', space=smem, size = 0x4, offset = 0x4, fixed_abs, tag = 'smem constant byte address 0x4 - core index']
  #allocation1 [shape = 'u32[144,128]{1,0:T(1,128)}', space=vmem, size = 0x12000, scoped, tag = 'internal scratch']
  %s0 = inlined_call_operand.hbm [shape: bf16[512,128], index: 0, kind: input, shape index: {}]
  %s1 = inlined_call_operand.hbm [shape: bf16[128,128], index: 1, kind: input, shape index: {}]
  %s2 = inlined_call_operand.vmem [shape: f32[1,128], index: 2, kind: input, shape index: {}]
  %s3 = inlined_call_operand.hbm [shape: bf16[512,128], index: 3, kind: output, shape index: {}]
  %s4 = sld [smem:[#allocation0]]
  $region30: #{tpu_custom_call.1} parent=0
    _
  %s6 = ssub.s32 1, %s4
  %s7 = scalar_select 0, %s6, %s4
  $region1: #{tpu_custom_call.1} parent=0
    #allocation2 [shape = 'u8[131072]{0}', space=vmem, size = 0x20000, scoped, tag = 'input window, operand 0, single buffered']
    #allocation3 [shape = 's32[1]{0}', space=sflag, size = 0x4, scoped, tag = 'scoped memory for tpu_custom_call.1']
    #allocation4 [shape = 's32[1]{0}', space=sflag, size = 0x4, scoped, tag = 'scoped memory for tpu_custom_call.1']
    #allocation5 [shape = 'u8[32768]{0}', space=vmem, size = 0x8000, scoped, tag = 'input window, operand 1, single buffered']
    #allocation6 [shape = 's32[1]{0}', space=sflag, size = 0x4, scoped, tag = 'scoped memory for tpu_custom_call.1']
    #allocation7 [shape = 'u8[131072]{0}', space=vmem, size = 0x20000, scoped, tag = 'output window, operand 0, single buffered']
    %8 = vsyncpa [#allocation3], 0
    %9 = vsyncpa [#allocation6], 0
    %10 = vsyncpa [#allocation4], 0
    // Predicated region
    $region2: #{tpu_custom_call.1} parent=1 // pred_check
      _
    $region3: #{tpu_custom_call.1} parent=1 // pred_check_branch
      %12 = sbr.rel (0) target = $region5
    $region4: #{tpu_custom_call.1} parent=1 // pred_region
      %s14 = ssub.s32 4096, 4096
      %15 = vsyncadd [#allocation3], %s14
      %s16 = sshll.u32 [#allocation2], 4
      %s17 = int_to_ptr.vmem [resolvable:$true] %s16
      %22 = dma.hbm_to_vmem [thread:$0]  %s0, 4096, %s17, [#allocation3], 64, 64, 4
    $region5: #{tpu_custom_call.1} parent=1 // pred_fallthru
      _
    // Predicated region
    $region6: #{tpu_custom_call.1} parent=1 // pred_check
      _
    $region7: #{tpu_custom_call.1} parent=1 // pred_check_branch
      %24 = sbr.rel (0) target = $region9
    $region8: #{tpu_custom_call.1} parent=1 // pred_region
      %s26 = ssub.s32 1024, 1024
      %27 = vsyncadd [#allocation6], %s26
      %s28 = sshll.u32 [#allocation5], 4
      %s29 = int_to_ptr.vmem [resolvable:$true] %s28
      %34 = dma.hbm_to_vmem [thread:$0]  %s1, 1024, %s29, [#allocation6], 64, 64, 4
    $region9: #{tpu_custom_call.1} parent=1 // pred_fallthru
      _
    // Predicated region
    $region10: #{tpu_custom_call.1} parent=1 // pred_check
      _
    $region11: #{tpu_custom_call.1} parent=1 // pred_check_branch
      %36 = sbr.rel (0) target = $region13
    $region12: #{tpu_custom_call.1} parent=1 // pred_region
      _
    $region13: #{tpu_custom_call.1} parent=1 // pred_fallthru
      _
    // Predicated region
    $region14: #{tpu_custom_call.1} parent=1 // pred_check
      _
    $region15: #{tpu_custom_call.1} parent=1 // pred_check_branch
      %38 = sbr.rel (0) target = $region17
    $region16: #{tpu_custom_call.1} parent=1 // pred_region
      %39 = dma.done [#allocation3], 4096
    $region17: #{tpu_custom_call.1} parent=1 // pred_fallthru
      _
    // Predicated region
    $region18: #{tpu_custom_call.1} parent=1 // pred_check
      _
    $region19: #{tpu_custom_call.1} parent=1 // pred_check_branch
      %41 = sbr.rel (0) target = $region21
    $region20: #{tpu_custom_call.1} parent=1 // pred_region
      %42 = dma.done [#allocation6], 1024
    $region21: #{tpu_custom_call.1} parent=1 // pred_fallthru
      _
    %v44 = vld [vmem:[#allocation2] sm:$0xf]
    %v45 = vld [vmem:[#allocation2 + $0x4] sm:$0xf]
    %v46 = vld [vmem:[#allocation2 + $0x8] sm:$0xf]
    %v47 = vld [vmem:[#allocation2 + $0xc] sm:$0xf]
    %v48 = vld [vmem:[#allocation2 + $0x10] sm:$0xf]
    %v49 = vld [vmem:[#allocation2 + $0x14] sm:$0xf]
    %v50 = vld [vmem:[#allocation2 + $0x18] sm:$0xf]
    %v51 = vld [vmem:[#allocation2 + $0x1c] sm:$0xf]
    %v52 = vld [vmem:[#allocation2 + $0x20] sm:$0xf]
    %v53 = vld [vmem:[#allocation2 + $0x24] sm:$0xf]
    %v54 = vld [vmem:[#allocation2 + $0x28] sm:$0xf]
    %v55 = vld [vmem:[#allocation2 + $0x2c] sm:$0xf]
    %v56 = vld [vmem:[#allocation2 + $0x30] sm:$0xf]
    %v57 = vld [vmem:[#allocation2 + $0x34] sm:$0xf]
    %v58 = vld [vmem:[#allocation2 + $0x38] sm:$0xf]
    %v59 = vld [vmem:[#allocation2 + $0x3c] sm:$0xf]
    %v60 = vld [vmem:[#allocation2 + $0x40] sm:$0xf]
    %v61 = vld [vmem:[#allocation2 + $0x44] sm:$0xf]
    %v62 = vld [vmem:[#allocation2 + $0x48] sm:$0xf]
    %v63 = vld [vmem:[#allocation2 + $0x4c] sm:$0xf]
    %v64 = vld [vmem:[#allocation2 + $0x50] sm:$0xf]
    %v65 = vld [vmem:[#allocation2 + $0x54] sm:$0xf]
    %v66 = vld [vmem:[#allocation2 + $0x58] sm:$0xf]
    %v67 = vld [vmem:[#allocation2 + $0x5c] sm:$0xf]
    %v68 = vld [vmem:[#allocation2 + $0x60] sm:$0xf]
    %v69 = vld [vmem:[#allocation2 + $0x64] sm:$0xf]
    %v70 = vld [vmem:[#allocation2 + $0x68] sm:$0xf]
    %v71 = vld [vmem:[#allocation2 + $0x6c] sm:$0xf]
    %v72 = vld [vmem:[#allocation2 + $0x70] sm:$0xf]
    %v73 = vld [vmem:[#allocation2 + $0x74] sm:$0xf]
    %v74 = vld [vmem:[#allocation2 + $0x78] sm:$0xf]
    %v75 = vld [vmem:[#allocation2 + $0x7c] sm:$0xf]
    %v76 = vld [vmem:[#allocation2 + $0x80] sm:$0xf]
    %v77 = vld [vmem:[#allocation2 + $0x84] sm:$0xf]
    %v78 = vld [vmem:[#allocation2 + $0x88] sm:$0xf]
    %v79 = vld [vmem:[#allocation2 + $0x8c] sm:$0xf]
    %v80 = vld [vmem:[#allocation2 + $0x90] sm:$0xf]
    %v81 = vld [vmem:[#allocation2 + $0x94] sm:$0xf]
    %v82 = vld [vmem:[#allocation2 + $0x98] sm:$0xf]
    %v83 = vld [vmem:[#allocation2 + $0x9c] sm:$0xf]
    %v84 = vld [vmem:[#allocation2 + $0xa0] sm:$0xf]
    %v85 = vld [vmem:[#allocation2 + $0xa4] sm:$0xf]
    %v86 = vld [vmem:[#allocation2 + $0xa8] sm:$0xf]
    %v87 = vld [vmem:[#allocation2 + $0xac] sm:$0xf]
    %v88 = vld [vmem:[#allocation2 + $0xb0] sm:$0xf]
    %v89 = vld [vmem:[#allocation2 + $0xb4] sm:$0xf]
    %v90 = vld [vmem:[#allocation2 + $0xb8] sm:$0xf]
    %v91 = vld [vmem:[#allocation2 + $0xbc] sm:$0xf]
    %v92 = vld [vmem:[#allocation2 + $0xc0] sm:$0xf]
    %v93 = vld [vmem:[#allocation2 + $0xc4] sm:$0xf]
    %v94 = vld [vmem:[#allocation2 + $0xc8] sm:$0xf]
    %v95 = vld [vmem:[#allocation2 + $0xcc] sm:$0xf]
    %v96 = vld [vmem:[#allocation2 + $0xd0] sm:$0xf]
    %v97 = vld [vmem:[#allocation2 + $0xd4] sm:$0xf]
    %v98 = vld [vmem:[#allocation2 + $0xd8] sm:$0xf]
    %v99 = vld [vmem:[#allocation2 + $0xdc] sm:$0xf]
    %v100 = vld [vmem:[#allocation2 + $0xe0] sm:$0xf]
    %v101 = vld [vmem:[#allocation2 + $0xe4] sm:$0xf]
    %v102 = vld [vmem:[#allocation2 + $0xe8] sm:$0xf]
    %v103 = vld [vmem:[#allocation2 + $0xec] sm:$0xf]
    %v104 = vld [vmem:[#allocation2 + $0xf0] sm:$0xf]
    %v105 = vld [vmem:[#allocation2 + $0xf4] sm:$0xf]
    %v106 = vld [vmem:[#allocation2 + $0xf8] sm:$0xf]
    %v107 = vld [vmem:[#allocation2 + $0xfc] sm:$0xf]
    %v108 = vld [vmem:[#allocation5] sm:$0xf]
    %v109 = vld [vmem:[#allocation5 + $0x4] sm:$0xf]
    %v110 = vld [vmem:[#allocation5 + $0x8] sm:$0xf]
    %v111 = vld [vmem:[#allocation5 + $0xc] sm:$0xf]
    %v112 = vld [vmem:[#allocation5 + $0x10] sm:$0xf]
    %v113 = vld [vmem:[#allocation5 + $0x14] sm:$0xf]
    %v114 = vld [vmem:[#allocation5 + $0x18] sm:$0xf]
    %v115 = vld [vmem:[#allocation5 + $0x1c] sm:$0xf]
    %v116 = vld [vmem:[#allocation5 + $0x20] sm:$0xf]
    %v117 = vld [vmem:[#allocation5 + $0x24] sm:$0xf]
    %v118 = vld [vmem:[#allocation5 + $0x28] sm:$0xf]
    %v119 = vld [vmem:[#allocation5 + $0x2c] sm:$0xf]
    %v120 = vld [vmem:[#allocation5 + $0x30] sm:$0xf]
    %v121 = vld [vmem:[#allocation5 + $0x34] sm:$0xf]
    %v122 = vld [vmem:[#allocation5 + $0x38] sm:$0xf]
    %v123 = vld [vmem:[#allocation5 + $0x3c] sm:$0xf]
    %v124 = vld [vmem:[%s2] sm:$0x1]
    %v126 = vlaneseq
    %v127 = vshrl.u32 %v126, 7
    %v128 = vsub.s32 0, %v127
    %v129 = vrot.slane %v124, %v128
    %v195 = vunpack.c.l.b16 %v44
    %v196 = vunpack.c.l.b16 %v45
    %v197 = vunpack.c.l.b16 %v46
    %v198 = vunpack.c.l.b16 %v47
    %v199 = vunpack.c.l.b16 %v48
    %v200 = vunpack.c.l.b16 %v49
    %v201 = vunpack.c.l.b16 %v50
    %v202 = vunpack.c.l.b16 %v51
    %v203 = vunpack.c.l.b16 %v52
    %v204 = vunpack.c.l.b16 %v53
    %v205 = vunpack.c.l.b16 %v54
    %v206 = vunpack.c.l.b16 %v55
    %v207 = vunpack.c.l.b16 %v56
    %v208 = vunpack.c.l.b16 %v57
    %v209 = vunpack.c.l.b16 %v58
    %v210 = vunpack.c.l.b16 %v59
    %v211 = vunpack.c.l.b16 %v60
    %v212 = vunpack.c.l.b16 %v61
    %v213 = vunpack.c.l.b16 %v62
    %v214 = vunpack.c.l.b16 %v63
    %v215 = vunpack.c.l.b16 %v64
    %v216 = vunpack.c.l.b16 %v65
    %v217 = vunpack.c.l.b16 %v66
    %v218 = vunpack.c.l.b16 %v67
    %v219 = vunpack.c.l.b16 %v68
    %v220 = vunpack.c.l.b16 %v69
    %v221 = vunpack.c.l.b16 %v70
    %v222 = vunpack.c.l.b16 %v71
    %v223 = vunpack.c.l.b16 %v72
    %v224 = vunpack.c.l.b16 %v73
    %v225 = vunpack.c.l.b16 %v74
    %v226 = vunpack.c.l.b16 %v75
    %v227 = vunpack.c.l.b16 %v76
    %v228 = vunpack.c.l.b16 %v77
    %v229 = vunpack.c.l.b16 %v78
    %v230 = vunpack.c.l.b16 %v79
    %v231 = vunpack.c.l.b16 %v80
    %v232 = vunpack.c.l.b16 %v81
    %v233 = vunpack.c.l.b16 %v82
    %v234 = vunpack.c.l.b16 %v83
    %v235 = vunpack.c.l.b16 %v84
    %v236 = vunpack.c.l.b16 %v85
    %v237 = vunpack.c.l.b16 %v86
    %v238 = vunpack.c.l.b16 %v87
    %v239 = vunpack.c.l.b16 %v88
    %v240 = vunpack.c.l.b16 %v89
    %v241 = vunpack.c.l.b16 %v90
    %v242 = vunpack.c.l.b16 %v91
    %v243 = vunpack.c.l.b16 %v92
    %v244 = vunpack.c.l.b16 %v93
    %v245 = vunpack.c.l.b16 %v94
    %v246 = vunpack.c.l.b16 %v95
    %v247 = vunpack.c.l.b16 %v96
    %v248 = vunpack.c.l.b16 %v97
    %v249 = vunpack.c.l.b16 %v98
    %v250 = vunpack.c.l.b16 %v99
    %v251 = vunpack.c.l.b16 %v100
    %v252 = vunpack.c.l.b16 %v101
    %v253 = vunpack.c.l.b16 %v102
    %v254 = vunpack.c.l.b16 %v103
    %v255 = vunpack.c.l.b16 %v104
    %v256 = vunpack.c.l.b16 %v105
    %v257 = vunpack.c.l.b16 %v106
    %v258 = vunpack.c.l.b16 %v107
    %v259 = vpack.c.b16 %v196, %v195
    %v260 = vpack.c.b16 %v198, %v197
    %v261 = vpack.c.b16 %v200, %v199
    %v262 = vpack.c.b16 %v202, %v201
    %v263 = vpack.c.b16 %v204, %v203
    %v264 = vpack.c.b16 %v206, %v205
    %v265 = vpack.c.b16 %v208, %v207
    %v266 = vpack.c.b16 %v210, %v209
    %v267 = vpack.c.b16 %v212, %v211
    %v268 = vpack.c.b16 %v214, %v213
    %v269 = vpack.c.b16 %v216, %v215
    %v270 = vpack.c.b16 %v218, %v217
    %v271 = vpack.c.b16 %v220, %v219
    %v272 = vpack.c.b16 %v222, %v221
    %v273 = vpack.c.b16 %v224, %v223
    %v274 = vpack.c.b16 %v226, %v225
    %v275 = vpack.c.b16 %v228, %v227
    %v276 = vpack.c.b16 %v230, %v229
    %v277 = vpack.c.b16 %v232, %v231
    %v278 = vpack.c.b16 %v234, %v233
    %v279 = vpack.c.b16 %v236, %v235
    %v280 = vpack.c.b16 %v238, %v237
    %v281 = vpack.c.b16 %v240, %v239
    %v282 = vpack.c.b16 %v242, %v241
    %v283 = vpack.c.b16 %v244, %v243
    %v284 = vpack.c.b16 %v246, %v245
    %v285 = vpack.c.b16 %v248, %v247
    %v286 = vpack.c.b16 %v250, %v249
    %v287 = vpack.c.b16 %v252, %v251
    %v288 = vpack.c.b16 %v254, %v253
    %v289 = vpack.c.b16 %v256, %v255
    %v290 = vpack.c.b16 %v258, %v257
    %v339 = vunpack.c.l.b16 %v108
    %v340 = vunpack.c.l.b16 %v109
    %v341 = vunpack.c.l.b16 %v110
    %v342 = vunpack.c.l.b16 %v111
    %v343 = vunpack.c.l.b16 %v112
    %v344 = vunpack.c.l.b16 %v113
    %v345 = vunpack.c.l.b16 %v114
    %v346 = vunpack.c.l.b16 %v115
    %v347 = vunpack.c.l.b16 %v116
    %v348 = vunpack.c.l.b16 %v117
    %v349 = vunpack.c.l.b16 %v118
    %v350 = vunpack.c.l.b16 %v119
    %v351 = vunpack.c.l.b16 %v120
    %v352 = vunpack.c.l.b16 %v121
    %v353 = vunpack.c.l.b16 %v122
    %v354 = vunpack.c.l.b16 %v123
    %v355 = vpack.c.b16 %v340, %v339
    %v356 = vpack.c.b16 %v342, %v341
    %v357 = vpack.c.b16 %v344, %v343
    %v358 = vpack.c.b16 %v346, %v345
    %v359 = vpack.c.b16 %v348, %v347
    %v360 = vpack.c.b16 %v350, %v349
    %v361 = vpack.c.b16 %v352, %v351
    %v362 = vpack.c.b16 %v354, %v353
    %371 = vmatprep.subr.bf16.mxu0 0
    %372 = vmatpush1.bf16.msra.mxu0 %v362
    %373 = vmatprep.subr.bf16.mxu0 0
    %374 = vmatpush1.bf16.msra.mxu0 %v361
    %375 = vmatprep.subr.bf16.mxu0 0
    %376 = vmatpush1.bf16.msra.mxu0 %v360
    %377 = vmatprep.subr.bf16.mxu0 0
    %378 = vmatpush1.bf16.msra.mxu0 %v359
    %379 = vmatprep.subr.bf16.mxu0 0
    %380 = vmatpush1.bf16.msra.mxu0 %v358
    %381 = vmatprep.subr.bf16.mxu0 0
    %382 = vmatpush1.bf16.msra.mxu0 %v357
    %383 = vmatprep.subr.bf16.mxu0 0
    %384 = vmatpush1.bf16.msra.mxu0 %v356
    %385 = vmatprep.subr.bf16.mxu0 0
    %386 = vmatpush1.bf16.msra.mxu0 %v355
    %387 = vmatprep.subr.bf16.mxu0 0
    %388 = vmatpush2.bf16.msra.mxu0 0
    %389 = vmatprep.subr.bf16.mxu0 0
    %390 = vmatpush2.bf16.msra.mxu0 0
    %391 = vmatprep.subr.bf16.mxu0 0
    %392 = vmatpush2.bf16.msra.mxu0 0
    %393 = vmatprep.subr.bf16.mxu0 0
    %394 = vmatpush2.bf16.msra.mxu0 0
    %395 = vmatprep.subr.bf16.mxu0 0
    %396 = vmatpush2.bf16.msra.mxu0 0
    %397 = vmatprep.subr.bf16.mxu0 0
    %398 = vmatpush2.bf16.msra.mxu0 0
    %399 = vmatprep.subr.bf16.mxu0 0
    %400 = vmatpush2.bf16.msra.mxu0 0
    %401 = vmatprep.subr.bf16.mxu0 0
    %402 = vmatpush2.bf16.msra.mxu0 0
    %403 = vmatprep.mubr.bf16.mxu0 0
    %404 = vmatmul.mubr.bf16.gmra.mxu0 %v259
    %v405 = vpop.f32.mrf.mxu0
    %v406 = vadd.f32 %v129, %v405
    %v407 = vpop.f32.mrf.mxu0
    %v408 = vpop.f32.mrf.mxu0
    %v409 = vadd.f32 %v129, %v408
    %v410 = vpop.f32.mrf.mxu0
    %411 = vmatprep.mubr.bf16.mxu0 0
    %412 = vmatmul.mubr.bf16.gmra.mxu0 %v260
    %v413 = vpop.f32.mrf.mxu0
    %v414 = vadd.f32 %v129, %v413
    %v415 = vpop.f32.mrf.mxu0
    %v416 = vpop.f32.mrf.mxu0
    %v417 = vadd.f32 %v129, %v416
    %v418 = vpop.f32.mrf.mxu0
    %419 = vmatprep.mubr.bf16.mxu0 0
    %420 = vmatmul.mubr.bf16.gmra.mxu0 %v261
    %v421 = vpop.f32.mrf.mxu0
    %v422 = vadd.f32 %v129, %v421
    %v423 = vpop.f32.mrf.mxu0
    %v424 = vpop.f32.mrf.mxu0
    %v425 = vadd.f32 %v129, %v424
    %v426 = vpop.f32.mrf.mxu0
    %427 = vmatprep.mubr.bf16.mxu0 0
    %428 = vmatmul.mubr.bf16.gmra.mxu0 %v262
    %v429 = vpop.f32.mrf.mxu0
    %v430 = vadd.f32 %v129, %v429
    %v431 = vpop.f32.mrf.mxu0
    %v432 = vpop.f32.mrf.mxu0
    %v433 = vadd.f32 %v129, %v432
    %v434 = vpop.f32.mrf.mxu0
    %435 = vmatprep.mubr.bf16.mxu0 0
    %436 = vmatmul.mubr.bf16.gmra.mxu0 %v263
    %v437 = vpop.f32.mrf.mxu0
    %v438 = vadd.f32 %v129, %v437
    %v439 = vpop.f32.mrf.mxu0
    %v440 = vpop.f32.mrf.mxu0
    %v441 = vadd.f32 %v129, %v440
    %v442 = vpop.f32.mrf.mxu0
    %443 = vmatprep.mubr.bf16.mxu0 0
    %444 = vmatmul.mubr.bf16.gmra.mxu0 %v264
    %v445 = vpop.f32.mrf.mxu0
    %v446 = vadd.f32 %v129, %v445
    %v447 = vpop.f32.mrf.mxu0
    %v448 = vpop.f32.mrf.mxu0
    %v449 = vadd.f32 %v129, %v448
    %v450 = vpop.f32.mrf.mxu0
    %451 = vmatprep.mubr.bf16.mxu0 0
    %452 = vmatmul.mubr.bf16.gmra.mxu0 %v265
    %v453 = vpop.f32.mrf.mxu0
    %v454 = vadd.f32 %v129, %v453
    %v455 = vpop.f32.mrf.mxu0
    %v456 = vpop.f32.mrf.mxu0
    %v457 = vadd.f32 %v129, %v456
    %v458 = vpop.f32.mrf.mxu0
    %459 = vmatprep.mubr.bf16.mxu0 0
    %460 = vmatmul.mubr.bf16.gmra.mxu0 %v266
    %v461 = vpop.f32.mrf.mxu0
    %v462 = vadd.f32 %v129, %v461
    %v463 = vpop.f32.mrf.mxu0
    %v464 = vpop.f32.mrf.mxu0
    %v465 = vadd.f32 %v129, %v464
    %v466 = vpop.f32.mrf.mxu0
    %467 = vmatprep.mubr.bf16.mxu0 0
    %468 = vmatmul.mubr.bf16.gmra.mxu0 %v267
    %v469 = vpop.f32.mrf.mxu0
    %v470 = vadd.f32 %v129, %v469
    %v471 = vpop.f32.mrf.mxu0
    %v472 = vpop.f32.mrf.mxu0
    %v473 = vadd.f32 %v129, %v472
    %v474 = vpop.f32.mrf.mxu0
    %475 = vmatprep.mubr.bf16.mxu0 0
    %476 = vmatmul.mubr.bf16.gmra.mxu0 %v268
    %v477 = vpop.f32.mrf.mxu0
    %v478 = vadd.f32 %v129, %v477
    %v479 = vpop.f32.mrf.mxu0
    %v480 = vpop.f32.mrf.mxu0
    %v481 = vadd.f32 %v129, %v480
    %v482 = vpop.f32.mrf.mxu0
    %483 = vmatprep.mubr.bf16.mxu0 0
    %484 = vmatmul.mubr.bf16.gmra.mxu0 %v269
    %v485 = vpop.f32.mrf.mxu0
    %v486 = vadd.f32 %v129, %v485
    %v487 = vpop.f32.mrf.mxu0
    %v488 = vpop.f32.mrf.mxu0
    %v489 = vadd.f32 %v129, %v488
    %v490 = vpop.f32.mrf.mxu0
    %491 = vmatprep.mubr.bf16.mxu0 0
    %492 = vmatmul.mubr.bf16.gmra.mxu0 %v270
    %v493 = vpop.f32.mrf.mxu0
    %v494 = vadd.f32 %v129, %v493
    %v495 = vpop.f32.mrf.mxu0
    %v496 = vpop.f32.mrf.mxu0
    %v497 = vadd.f32 %v129, %v496
    %v498 = vpop.f32.mrf.mxu0
    %499 = vmatprep.mubr.bf16.mxu0 0
    %500 = vmatmul.mubr.bf16.gmra.mxu0 %v271
    %v501 = vpop.f32.mrf.mxu0
    %v502 = vadd.f32 %v129, %v501
    %v503 = vpop.f32.mrf.mxu0
    %v504 = vpop.f32.mrf.mxu0
    %v505 = vadd.f32 %v129, %v504
    %v506 = vpop.f32.mrf.mxu0
    %507 = vmatprep.mubr.bf16.mxu0 0
    %508 = vmatmul.mubr.bf16.gmra.mxu0 %v272
    %v509 = vpop.f32.mrf.mxu0
    %v510 = vadd.f32 %v129, %v509
    %v511 = vpop.f32.mrf.mxu0
    %v512 = vpop.f32.mrf.mxu0
    %v513 = vadd.f32 %v129, %v512
    %v514 = vpop.f32.mrf.mxu0
    %515 = vmatprep.mubr.bf16.mxu0 0
    %516 = vmatmul.mubr.bf16.gmra.mxu0 %v273
    %v517 = vpop.f32.mrf.mxu0
    %v518 = vadd.f32 %v129, %v517
    %v519 = vpop.f32.mrf.mxu0
    %v520 = vpop.f32.mrf.mxu0
    %v521 = vadd.f32 %v129, %v520
    %v522 = vpop.f32.mrf.mxu0
    %523 = vmatprep.mubr.bf16.mxu0 0
    %524 = vmatmul.mubr.bf16.gmra.mxu0 %v274
    %v525 = vpop.f32.mrf.mxu0
    %v526 = vadd.f32 %v129, %v525
    %v527 = vpop.f32.mrf.mxu0
    %v528 = vpop.f32.mrf.mxu0
    %v529 = vadd.f32 %v129, %v528
    %v530 = vpop.f32.mrf.mxu0
    %531 = vmatprep.mubr.bf16.mxu0 0
    %532 = vmatmul.mubr.bf16.gmra.mxu0 %v275
    %v533 = vpop.f32.mrf.mxu0
    %v534 = vadd.f32 %v129, %v533
    %v535 = vpop.f32.mrf.mxu0
    %v536 = vpop.f32.mrf.mxu0
    %v537 = vadd.f32 %v129, %v536
    %v538 = vpop.f32.mrf.mxu0
    %539 = vmatprep.mubr.bf16.mxu0 0
    %540 = vmatmul.mubr.bf16.gmra.mxu0 %v276
    %v541 = vpop.f32.mrf.mxu0
    %v542 = vadd.f32 %v129, %v541
    %v543 = vpop.f32.mrf.mxu0
    %v544 = vpop.f32.mrf.mxu0
    %v545 = vadd.f32 %v129, %v544
    %v546 = vpop.f32.mrf.mxu0
    %547 = vmatprep.mubr.bf16.mxu0 0
    %548 = vmatmul.mubr.bf16.gmra.mxu0 %v277
    %v549 = vpop.f32.mrf.mxu0
    %v550 = vadd.f32 %v129, %v549
    %v551 = vpop.f32.mrf.mxu0
    %v552 = vpop.f32.mrf.mxu0
    %v553 = vadd.f32 %v129, %v552
    %v554 = vpop.f32.mrf.mxu0
    %555 = vmatprep.mubr.bf16.mxu0 0
    %556 = vmatmul.mubr.bf16.gmra.mxu0 %v278
    %v557 = vpop.f32.mrf.mxu0
    %v558 = vadd.f32 %v129, %v557
    %v559 = vpop.f32.mrf.mxu0
    %v560 = vpop.f32.mrf.mxu0
    %v561 = vadd.f32 %v129, %v560
    %v562 = vpop.f32.mrf.mxu0
    %563 = vmatprep.mubr.bf16.mxu0 0
    %564 = vmatmul.mubr.bf16.gmra.mxu0 %v279
    %v565 = vpop.f32.mrf.mxu0
    %v566 = vadd.f32 %v129, %v565
    %v567 = vpop.f32.mrf.mxu0
    %v568 = vpop.f32.mrf.mxu0
    %v569 = vadd.f32 %v129, %v568
    %v570 = vpop.f32.mrf.mxu0
    %571 = vmatprep.mubr.bf16.mxu0 0
    %572 = vmatmul.mubr.bf16.gmra.mxu0 %v280
    %v573 = vpop.f32.mrf.mxu0
    %v574 = vadd.f32 %v129, %v573
    %v575 = vpop.f32.mrf.mxu0
    %v576 = vpop.f32.mrf.mxu0
    %v577 = vadd.f32 %v129, %v576
    %v578 = vpop.f32.mrf.mxu0
    %579 = vmatprep.mubr.bf16.mxu0 0
    %580 = vmatmul.mubr.bf16.gmra.mxu0 %v281
    %v581 = vpop.f32.mrf.mxu0
    %v582 = vadd.f32 %v129, %v581
    %v583 = vpop.f32.mrf.mxu0
    %v584 = vpop.f32.mrf.mxu0
    %v585 = vadd.f32 %v129, %v584
    %v586 = vpop.f32.mrf.mxu0
    %587 = vmatprep.mubr.bf16.mxu0 0
    %588 = vmatmul.mubr.bf16.gmra.mxu0 %v282
    %v589 = vpop.f32.mrf.mxu0
    %v590 = vadd.f32 %v129, %v589
    %v591 = vpop.f32.mrf.mxu0
    %v592 = vpop.f32.mrf.mxu0
    %v593 = vadd.f32 %v129, %v592
    %v594 = vpop.f32.mrf.mxu0
    %595 = vmatprep.mubr.bf16.mxu0 0
    %596 = vmatmul.mubr.bf16.gmra.mxu0 %v283
    %v597 = vpop.f32.mrf.mxu0
    %v598 = vadd.f32 %v129, %v597
    %v599 = vpop.f32.mrf.mxu0
    %v600 = vpop.f32.mrf.mxu0
    %v601 = vadd.f32 %v129, %v600
    %v602 = vpop.f32.mrf.mxu0
    %603 = vmatprep.mubr.bf16.mxu0 0
    %604 = vmatmul.mubr.bf16.gmra.mxu0 %v284
    %v605 = vpop.f32.mrf.mxu0
    %v606 = vadd.f32 %v129, %v605
    %v607 = vpop.f32.mrf.mxu0
    %v608 = vpop.f32.mrf.mxu0
    %v609 = vadd.f32 %v129, %v608
    %v610 = vpop.f32.mrf.mxu0
    %611 = vmatprep.mubr.bf16.mxu0 0
    %612 = vmatmul.mubr.bf16.gmra.mxu0 %v285
    %v613 = vpop.f32.mrf.mxu0
    %v614 = vadd.f32 %v129, %v613
    %v615 = vpop.f32.mrf.mxu0
    %v616 = vpop.f32.mrf.mxu0
    %v617 = vadd.f32 %v129, %v616
    %v618 = vpop.f32.mrf.mxu0
    %619 = vmatprep.mubr.bf16.mxu0 0
    %620 = vmatmul.mubr.bf16.gmra.mxu0 %v286
    %v621 = vpop.f32.mrf.mxu0
    %v622 = vadd.f32 %v129, %v621
    %v623 = vpop.f32.mrf.mxu0
    %v624 = vpop.f32.mrf.mxu0
    %v625 = vadd.f32 %v129, %v624
    %v626 = vpop.f32.mrf.mxu0
    %627 = vmatprep.mubr.bf16.mxu0 0
    %628 = vmatmul.mubr.bf16.gmra.mxu0 %v287
    %v629 = vpop.f32.mrf.mxu0
    %v630 = vadd.f32 %v129, %v629
    %v631 = vpop.f32.mrf.mxu0
    %v632 = vpop.f32.mrf.mxu0
    %v633 = vadd.f32 %v129, %v632
    %v634 = vpop.f32.mrf.mxu0
    %635 = vmatprep.mubr.bf16.mxu0 0
    %636 = vmatmul.mubr.bf16.gmra.mxu0 %v288
    %v637 = vpop.f32.mrf.mxu0
    %v638 = vadd.f32 %v129, %v637
    %v639 = vpop.f32.mrf.mxu0
    %v640 = vpop.f32.mrf.mxu0
    %v641 = vadd.f32 %v129, %v640
    %v642 = vpop.f32.mrf.mxu0
    %643 = vmatprep.mubr.bf16.mxu0 0
    %644 = vmatmul.mubr.bf16.gmra.mxu0 %v289
    %v645 = vpop.f32.mrf.mxu0
    %v646 = vadd.f32 %v129, %v645
    %v647 = vpop.f32.mrf.mxu0
    %v648 = vpop.f32.mrf.mxu0
    %v649 = vadd.f32 %v129, %v648
    %v650 = vpop.f32.mrf.mxu0
    %651 = vmatprep.mubr.bf16.mxu0 0
    %652 = vmatmul.mubr.bf16.gmra.mxu0 %v290
    %v653 = vpop.f32.mrf.mxu0
    %v654 = vadd.f32 %v129, %v653
    %v655 = vpop.f32.mrf.mxu0
    %v656 = vpop.f32.mrf.mxu0
    %v657 = vadd.f32 %v129, %v656
    %v658 = vpop.f32.mrf.mxu0
    %659 = vdwg.mxu0
    %v660 = vpack.c.bf16 %v409, %v406
    %v661 = vpack.c.bf16 %v417, %v414
    %v662 = vpack.c.bf16 %v425, %v422
    %v663 = vpack.c.bf16 %v433, %v430
    %v664 = vpack.c.bf16 %v441, %v438
    %v665 = vpack.c.bf16 %v449, %v446
    %v666 = vpack.c.bf16 %v457, %v454
    %v667 = vpack.c.bf16 %v465, %v462
    %v668 = vpack.c.bf16 %v473, %v470
    %v669 = vpack.c.bf16 %v481, %v478
    %v670 = vpack.c.bf16 %v489, %v486
    %v671 = vpack.c.bf16 %v497, %v494
    %v672 = vpack.c.bf16 %v505, %v502
    %v673 = vpack.c.bf16 %v513, %v510
    %v674 = vpack.c.bf16 %v521, %v518
    %v675 = vpack.c.bf16 %v529, %v526
    %v676 = vpack.c.bf16 %v537, %v534
    %v677 = vpack.c.bf16 %v545, %v542
    %v678 = vpack.c.bf16 %v553, %v550
    %v679 = vpack.c.bf16 %v561, %v558
    %v680 = vpack.c.bf16 %v569, %v566
    %v681 = vpack.c.bf16 %v577, %v574
    %v682 = vpack.c.bf16 %v585, %v582
    %v683 = vpack.c.bf16 %v593, %v590
    %v684 = vpack.c.bf16 %v601, %v598
    %v685 = vpack.c.bf16 %v609, %v606
    %v686 = vpack.c.bf16 %v617, %v614
    %v687 = vpack.c.bf16 %v625, %v622
    %v688 = vpack.c.bf16 %v633, %v630
    %v689 = vpack.c.bf16 %v641, %v638
    %v690 = vpack.c.bf16 %v649, %v646
    %v691 = vpack.c.bf16 %v657, %v654
    %v724 = vunpack.c.l.b16 %v660
    %v725 = vunpack.c.h.b16 %v660
    %v726 = vunpack.c.l.b16 %v661
    %v727 = vunpack.c.h.b16 %v661
    %v728 = vunpack.c.l.b16 %v662
    %v729 = vunpack.c.h.b16 %v662
    %v730 = vunpack.c.l.b16 %v663
    %v731 = vunpack.c.h.b16 %v663
    %v732 = vunpack.c.l.b16 %v664
    %v733 = vunpack.c.h.b16 %v664
    %v734 = vunpack.c.l.b16 %v665
    %v735 = vunpack.c.h.b16 %v665
    %v736 = vunpack.c.l.b16 %v666
    %v737 = vunpack.c.h.b16 %v666
    %v738 = vunpack.c.l.b16 %v667
    %v739 = vunpack.c.h.b16 %v667
    %v740 = vunpack.c.l.b16 %v668
    %v741 = vunpack.c.h.b16 %v668
    %v742 = vunpack.c.l.b16 %v669
    %v743 = vunpack.c.h.b16 %v669
    %v744 = vunpack.c.l.b16 %v670
    %v745 = vunpack.c.h.b16 %v670
    %v746 = vunpack.c.l.b16 %v671
    %v747 = vunpack.c.h.b16 %v671
    %v748 = vunpack.c.l.b16 %v672
    %v749 = vunpack.c.h.b16 %v672
    %v750 = vunpack.c.l.b16 %v673
    %v751 = vunpack.c.h.b16 %v673
    %v752 = vunpack.c.l.b16 %v674
    %v753 = vunpack.c.h.b16 %v674
    %v754 = vunpack.c.l.b16 %v675
    %v755 = vunpack.c.h.b16 %v675
    %v756 = vunpack.c.l.b16 %v676
    %v757 = vunpack.c.h.b16 %v676
    %v758 = vunpack.c.l.b16 %v677
    %v759 = vunpack.c.h.b16 %v677
    %v760 = vunpack.c.l.b16 %v678
    %v761 = vunpack.c.h.b16 %v678
    %v762 = vunpack.c.l.b16 %v679
    %v763 = vunpack.c.h.b16 %v679
    %v764 = vunpack.c.l.b16 %v680
    %v765 = vunpack.c.h.b16 %v680
    %v766 = vunpack.c.l.b16 %v681
    %v767 = vunpack.c.h.b16 %v681
    %v768 = vunpack.c.l.b16 %v682
    %v769 = vunpack.c.h.b16 %v682
    %v770 = vunpack.c.l.b16 %v683
    %v771 = vunpack.c.h.b16 %v683
    %v772 = vunpack.c.l.b16 %v684
    %v773 = vunpack.c.h.b16 %v684
    %v774 = vunpack.c.l.b16 %v685
    %v775 = vunpack.c.h.b16 %v685
    %v776 = vunpack.c.l.b16 %v686
    %v777 = vunpack.c.h.b16 %v686
    %v778 = vunpack.c.l.b16 %v687
    %v779 = vunpack.c.h.b16 %v687
    %v780 = vunpack.c.l.b16 %v688
    %v781 = vunpack.c.h.b16 %v688
    %v782 = vunpack.c.l.b16 %v689
    %v783 = vunpack.c.h.b16 %v689
    %v784 = vunpack.c.l.b16 %v690
    %v785 = vunpack.c.h.b16 %v690
    %v786 = vunpack.c.l.b16 %v691
    %v787 = vunpack.c.h.b16 %v691
    %v788 = vpack.c.b16 %v724, %v724
    %v789 = vpack.c.b16 %v725, %v725
    %v790 = vpack.c.b16 %v726, %v726
    %v791 = vpack.c.b16 %v727, %v727
    %v792 = vpack.c.b16 %v728, %v728
    %v793 = vpack.c.b16 %v729, %v729
    %v794 = vpack.c.b16 %v730, %v730
    %v795 = vpack.c.b16 %v731, %v731
    %v796 = vpack.c.b16 %v732, %v732
    %v797 = vpack.c.b16 %v733, %v733
    %v798 = vpack.c.b16 %v734, %v734
    %v799 = vpack.c.b16 %v735, %v735
    %v800 = vpack.c.b16 %v736, %v736
    %v801 = vpack.c.b16 %v737, %v737
    %v802 = vpack.c.b16 %v738, %v738
    %v803 = vpack.c.b16 %v739, %v739
    %v804 = vpack.c.b16 %v740, %v740
    %v805 = vpack.c.b16 %v741, %v741
    %v806 = vpack.c.b16 %v742, %v742
    %v807 = vpack.c.b16 %v743, %v743
    %v808 = vpack.c.b16 %v744, %v744
    %v809 = vpack.c.b16 %v745, %v745
    %v810 = vpack.c.b16 %v746, %v746
    %v811 = vpack.c.b16 %v747, %v747
    %v812 = vpack.c.b16 %v748, %v748
    %v813 = vpack.c.b16 %v749, %v749
    %v814 = vpack.c.b16 %v750, %v750
    %v815 = vpack.c.b16 %v751, %v751
    %v816 = vpack.c.b16 %v752, %v752
    %v817 = vpack.c.b16 %v753, %v753
    %v818 = vpack.c.b16 %v754, %v754
    %v819 = vpack.c.b16 %v755, %v755
    %v820 = vpack.c.b16 %v756, %v756
    %v821 = vpack.c.b16 %v757, %v757
    %v822 = vpack.c.b16 %v758, %v758
    %v823 = vpack.c.b16 %v759, %v759
    %v824 = vpack.c.b16 %v760, %v760
    %v825 = vpack.c.b16 %v761, %v761
    %v826 = vpack.c.b16 %v762, %v762
    %v827 = vpack.c.b16 %v763, %v763
    %v828 = vpack.c.b16 %v764, %v764
    %v829 = vpack.c.b16 %v765, %v765
    %v830 = vpack.c.b16 %v766, %v766
    %v831 = vpack.c.b16 %v767, %v767
    %v832 = vpack.c.b16 %v768, %v768
    %v833 = vpack.c.b16 %v769, %v769
    %v834 = vpack.c.b16 %v770, %v770
    %v835 = vpack.c.b16 %v771, %v771
    %v836 = vpack.c.b16 %v772, %v772
    %v837 = vpack.c.b16 %v773, %v773
    %v838 = vpack.c.b16 %v774, %v774
    %v839 = vpack.c.b16 %v775, %v775
    %v840 = vpack.c.b16 %v776, %v776
    %v841 = vpack.c.b16 %v777, %v777
    %v842 = vpack.c.b16 %v778, %v778
    %v843 = vpack.c.b16 %v779, %v779
    %v844 = vpack.c.b16 %v780, %v780
    %v845 = vpack.c.b16 %v781, %v781
    %v846 = vpack.c.b16 %v782, %v782
    %v847 = vpack.c.b16 %v783, %v783
    %v848 = vpack.c.b16 %v784, %v784
    %v849 = vpack.c.b16 %v785, %v785
    %v850 = vpack.c.b16 %v786, %v786
    %v851 = vpack.c.b16 %v787, %v787
    %916 = vst [vmem:[#allocation7] sm:$0xf] %v788
    %917 = vst [vmem:[#allocation7 + $0x4] sm:$0xf] %v789
    %918 = vst [vmem:[#allocation7 + $0x8] sm:$0xf] %v790
    %919 = vst [vmem:[#allocation7 + $0xc] sm:$0xf] %v791
    %920 = vst [vmem:[#allocation7 + $0x10] sm:$0xf] %v792
    %921 = vst [vmem:[#allocation7 + $0x14] sm:$0xf] %v793
    %922 = vst [vmem:[#allocation7 + $0x18] sm:$0xf] %v794
    %923 = vst [vmem:[#allocation7 + $0x1c] sm:$0xf] %v795
    %924 = vst [vmem:[#allocation7 + $0x20] sm:$0xf] %v796
    %925 = vst [vmem:[#allocation7 + $0x24] sm:$0xf] %v797
    %926 = vst [vmem:[#allocation7 + $0x28] sm:$0xf] %v798
    %927 = vst [vmem:[#allocation7 + $0x2c] sm:$0xf] %v799
    %928 = vst [vmem:[#allocation7 + $0x30] sm:$0xf] %v800
    %929 = vst [vmem:[#allocation7 + $0x34] sm:$0xf] %v801
    %930 = vst [vmem:[#allocation7 + $0x38] sm:$0xf] %v802
    %931 = vst [vmem:[#allocation7 + $0x3c] sm:$0xf] %v803
    %932 = vst [vmem:[#allocation7 + $0x40] sm:$0xf] %v804
    %933 = vst [vmem:[#allocation7 + $0x44] sm:$0xf] %v805
    %934 = vst [vmem:[#allocation7 + $0x48] sm:$0xf] %v806
    %935 = vst [vmem:[#allocation7 + $0x4c] sm:$0xf] %v807
    %936 = vst [vmem:[#allocation7 + $0x50] sm:$0xf] %v808
    %937 = vst [vmem:[#allocation7 + $0x54] sm:$0xf] %v809
    %938 = vst [vmem:[#allocation7 + $0x58] sm:$0xf] %v810
    %939 = vst [vmem:[#allocation7 + $0x5c] sm:$0xf] %v811
    %940 = vst [vmem:[#allocation7 + $0x60] sm:$0xf] %v812
    %941 = vst [vmem:[#allocation7 + $0x64] sm:$0xf] %v813
    %942 = vst [vmem:[#allocation7 + $0x68] sm:$0xf] %v814
    %943 = vst [vmem:[#allocation7 + $0x6c] sm:$0xf] %v815
    %944 = vst [vmem:[#allocation7 + $0x70] sm:$0xf] %v816
    %945 = vst [vmem:[#allocation7 + $0x74] sm:$0xf] %v817
    %946 = vst [vmem:[#allocation7 + $0x78] sm:$0xf] %v818
    %947 = vst [vmem:[#allocation7 + $0x7c] sm:$0xf] %v819
    %948 = vst [vmem:[#allocation7 + $0x80] sm:$0xf] %v820
    %949 = vst [vmem:[#allocation7 + $0x84] sm:$0xf] %v821
    %950 = vst [vmem:[#allocation7 + $0x88] sm:$0xf] %v822
    %951 = vst [vmem:[#allocation7 + $0x8c] sm:$0xf] %v823
    %952 = vst [vmem:[#allocation7 + $0x90] sm:$0xf] %v824
    %953 = vst [vmem:[#allocation7 + $0x94] sm:$0xf] %v825
    %954 = vst [vmem:[#allocation7 + $0x98] sm:$0xf] %v826
    %955 = vst [vmem:[#allocation7 + $0x9c] sm:$0xf] %v827
    %956 = vst [vmem:[#allocation7 + $0xa0] sm:$0xf] %v828
    %957 = vst [vmem:[#allocation7 + $0xa4] sm:$0xf] %v829
    %958 = vst [vmem:[#allocation7 + $0xa8] sm:$0xf] %v830
    %959 = vst [vmem:[#allocation7 + $0xac] sm:$0xf] %v831
    %960 = vst [vmem:[#allocation7 + $0xb0] sm:$0xf] %v832
    %961 = vst [vmem:[#allocation7 + $0xb4] sm:$0xf] %v833
    %962 = vst [vmem:[#allocation7 + $0xb8] sm:$0xf] %v834
    %963 = vst [vmem:[#allocation7 + $0xbc] sm:$0xf] %v835
    %964 = vst [vmem:[#allocation7 + $0xc0] sm:$0xf] %v836
    %965 = vst [vmem:[#allocation7 + $0xc4] sm:$0xf] %v837
    %966 = vst [vmem:[#allocation7 + $0xc8] sm:$0xf] %v838
    %967 = vst [vmem:[#allocation7 + $0xcc] sm:$0xf] %v839
    %968 = vst [vmem:[#allocation7 + $0xd0] sm:$0xf] %v840
    %969 = vst [vmem:[#allocation7 + $0xd4] sm:$0xf] %v841
    %970 = vst [vmem:[#allocation7 + $0xd8] sm:$0xf] %v842
    %971 = vst [vmem:[#allocation7 + $0xdc] sm:$0xf] %v843
    %972 = vst [vmem:[#allocation7 + $0xe0] sm:$0xf] %v844
    %973 = vst [vmem:[#allocation7 + $0xe4] sm:$0xf] %v845
    %974 = vst [vmem:[#allocation7 + $0xe8] sm:$0xf] %v846
    %975 = vst [vmem:[#allocation7 + $0xec] sm:$0xf] %v847
    %976 = vst [vmem:[#allocation7 + $0xf0] sm:$0xf] %v848
    %977 = vst [vmem:[#allocation7 + $0xf4] sm:$0xf] %v849
    %978 = vst [vmem:[#allocation7 + $0xf8] sm:$0xf] %v850
    %979 = vst [vmem:[#allocation7 + $0xfc] sm:$0xf] %v851
    // Predicated region
    $region22: #{tpu_custom_call.1} parent=1 // pred_check
      _
    $region23: #{tpu_custom_call.1} parent=1 // pred_check_branch
      %981 = sbr.rel (0) target = $region25
    $region24: #{tpu_custom_call.1} parent=1 // pred_region
      %s983 = ssub.s32 4096, 4096
      %984 = vsyncadd [#allocation4], %s983
      %s985 = sshll.u32 [#allocation7], 4
      %s986 = int_to_ptr.vmem [resolvable:$true] %s985
      %991 = dma.vmem_to_hbm [thread:$0]  %s986, 4096, %s3, [#allocation4], 64, 64, 4
    $region25: #{tpu_custom_call.1} parent=1 // pred_fallthru
      _
    // Predicated region
    $region26: #{tpu_custom_call.1} parent=1 // pred_check
      _
    $region27: #{tpu_custom_call.1} parent=1 // pred_check_branch
      %993 = sbr.rel (0) target = $region29
    $region28: #{tpu_custom_call.1} parent=1 // pred_region
      %994 = dma.done [#allocation4], 4096
    $region29: #{tpu_custom_call.1} parent=1 // pred_fallthru
      _
    %995 = vsyncpa [#allocation3], 1
    %996 = vsyncpa [#allocation6], 1
    %997 = vsyncpa [#allocation4], 1

</llo_original>
